<compile_context>
chip_gen: v7x
topology: tpu7x:2x2x1
jax: 0.10.0
libtpu: 0.0.40
codegen_flags: <defaults>
</compile_context>

<pallas_src>
import jax
import jax.numpy as jnp
from jax.experimental import pallas as pl
from jax.experimental.pallas import tpu as pltpu


def _round_up(n: int, m: int) -> int:
    return ((n + m - 1) // m) * m


def _make_sinenet_kernel(in_dim: int, h1: int, h2: int, out_dim: int,
                         chunk: int, n_chunks: int):
    """Kernel specialized at trace time.  Transposed layout:
    x block (in_dim, TB), out block (out_dim, TB); batch on the lane axis."""

    def kernel(x_ref, w1_ref, b1_ref, w2_ref, b2_ref, w3_ref, b3_ref, o_ref):
        # ---- resident weights: load once per grid step; hoist lane-broadcasts
        # out of the chunk loop (JAX does not CSE broadcast_in_dim). ----
        w2 = w2_ref[...]                                    # (h2, h1)
        b1c = jnp.broadcast_to(b1_ref[...], (h1, chunk))    # (h1, chunk)
        b2c = jnp.broadcast_to(b2_ref[...], (h2, chunk))    # (h2, chunk)

        if in_dim == 1:
            w1c = jnp.broadcast_to(w1_ref[...], (h1, chunk))  # (h1, chunk)
        else:
            w1 = w1_ref[...]                                  # (h1, in_dim)

        if out_dim == 1:
            w3c = jnp.broadcast_to(w3_ref[...], (h2, chunk))  # (h2, chunk)
            b3s = b3_ref[0]                                   # SMEM scalar
        else:
            w3 = w3_ref[...]                                  # (out_dim, h2)
            b3c = jnp.broadcast_to(b3_ref[...], (out_dim, chunk))

        # ---- static chunk loop over the lane (batch) axis.  Static slice
        # bounds -> plain aligned vector loads/stores; live intermediates stay
        # at (40, chunk) so they fit the vreg file instead of spilling. ----
        for c in range(n_chunks):
            lo, hi = c * chunk, (c + 1) * chunk
            x = x_ref[:, lo:hi]                               # (in_dim, chunk)

            # Layer 1 (F.linear + ReLU).  K = 1 -> pure VPU broadcast MAC.
            if in_dim == 1:
                h = w1c * x + b1c
            else:
                h = jnp.dot(w1, x, preferred_element_type=jnp.float32) + b1c
            h = jnp.maximum(h, 0.0)

            # Layer 2 (F.linear + ReLU).  MXU matmul with N = chunk full lanes.
            h = jnp.dot(w2, h, preferred_element_type=jnp.float32) + b2c
            h = jnp.maximum(h, 0.0)

            # Layer 3 (F.linear, no activation).  out_dim = 1 -> VPU multiply +
            # cheap sublane reduction (lane-dense result), scalar bias in SMEM.
            if out_dim == 1:
                y = jnp.sum(w3c * h, axis=0, keepdims=True) + b3s
            else:
                y = jnp.dot(w3, h, preferred_element_type=jnp.float32) + b3c

            o_ref[:, lo:hi] = y.astype(o_ref.dtype)

    return kernel


def sinenet_forward(x, weights, *, block_lanes=16384, chunk_lanes=512):
    """Pallas implementation of SineNet_functional.forward.

    x: (batch, in_features) float32
    weights: dict with PyTorch-style keys 'net.l{1,2,3}.weight' (out,in) and
             'net.l{1,2,3}.bias' (out,)
    """
    w1 = weights['net.l1.weight']   # (H1, in)
    b1 = weights['net.l1.bias']     # (H1,)
    w2 = weights['net.l2.weight']   # (H2, H1)
    b2 = weights['net.l2.bias']     # (H2,)
    w3 = weights['net.l3.weight']   # (out, H2)
    b3 = weights['net.l3.bias']     # (out,)

    h1, in_dim = w1.shape
    h2 = w2.shape[0]
    out_dim = w3.shape[0]
    batch = x.shape[0]

    # Lane-dense (transposed) data layout: batch on the 128-lane axis.
    # For in_dim == 1 this is a free reshape (no data movement).
    x_t = x.reshape(1, batch) if in_dim == 1 else x.T          # (in_dim, B)

    # y^T = W @ x^T -> PyTorch (out, in) weights used as-is, no transposes.
    w1_arg = w1                                 # (h1, in_dim)
    b1_arg = b1.reshape(h1, 1)
    w2_arg = w2                                 # (h2, h1)
    b2_arg = b2.reshape(h2, 1)
    if out_dim == 1:
        w3_arg = w3.reshape(h2, 1)              # column vector
        b3_arg = b3.reshape(1)                  # single scalar -> SMEM
    else:
        w3_arg = w3                             # (out_dim, h2)
        b3_arg = b3.reshape(out_dim, 1)

    # ---- batch (lane) tiling: no wrapper pad, no output slice.  The partial
    # last block (if any) is masked by Pallas on store. ----
    block_lanes = max(128, _round_up(int(block_lanes), 128))
    chunk_lanes = max(128, _round_up(int(chunk_lanes), 128))
    if batch <= 256:
        tb = batch                              # single step; block == full dims
    else:
        # >= 2 grid steps so both v7x TensorCores get work; lane tiles are
        # multiples of 128 (unmasked vst + dense DMA), capped to bound the
        # per-step tile (VMEM + in-kernel unroll).
        tb = min(block_lanes, _round_up(pl.cdiv(batch, 2), 128))
    grid = (pl.cdiv(batch, tb),)

    # In-kernel chunk width (keeps live intermediates small).
    if tb <= chunk_lanes:
        chunk = tb
    else:
        chunk = 128
        for c in (chunk_lanes, 1024, 512, 256, 128):
            if tb % c == 0:
                chunk = c
                break
    n_chunks = tb // chunk

    def resident(shape):
        # Weights / biases stay in VMEM across all grid steps.
        return pl.BlockSpec(shape, lambda i: (0, 0))

    if out_dim == 1:
        b3_spec = pl.BlockSpec(memory_space=pltpu.MemorySpace.SMEM)
    else:
        b3_spec = resident(b3_arg.shape)

    out_t = pl.pallas_call(
        _make_sinenet_kernel(in_dim, h1, h2, out_dim, chunk, n_chunks),
        out_shape=jax.ShapeDtypeStruct((out_dim, batch), x.dtype),
        grid=grid,
        in_specs=[
            pl.BlockSpec((in_dim, tb), lambda i: (0, i)),   # x: streamed, lane-dense
            resident(w1_arg.shape),
            resident(b1_arg.shape),
            resident(w2_arg.shape),
            resident(b2_arg.shape),
            resident(w3_arg.shape),
            b3_spec,
        ],
        out_specs=pl.BlockSpec((out_dim, tb), lambda i: (0, i)),
        compiler_params=pltpu.CompilerParams(
            dimension_semantics=("parallel",)),              # v7x: shard across 2 TCs
    )(x_t, w1_arg, b1_arg, w2_arg, b2_arg, w3_arg, b3_arg)

    # Back to PyTorch's (batch, out_features) layout (free reshape for out_dim==1).
    return out_t.reshape(batch, out_dim) if out_dim == 1 else out_t.T


def sinenet_reference(x, weights):
    h = x @ weights['net.l1.weight'].T + weights['net.l1.bias']
    h = jnp.maximum(h, 0.0)
    h = h @ weights['net.l2.weight'].T + weights['net.l2.bias']
    h = jnp.maximum(h, 0.0)
    return h @ weights['net.l3.weight'].T + weights['net.l3.bias']


if __name__ == "__main__":
    key = jax.random.PRNGKey(0)
    k_x, k1, k2, k3, k4, k5, k6 = jax.random.split(key, 7)

    batch, in_dim, hidden, out_dim = 24, 1, 40, 1

    weights = {
        'net.l1.weight': 0.1 * jax.random.normal(k1, (hidden, in_dim), dtype=jnp.float32),
        'net.l1.bias':   0.1 * jax.random.normal(k2, (hidden,), dtype=jnp.float32),
        'net.l2.weight': 0.1 * jax.random.normal(k3, (hidden, hidden), dtype=jnp.float32),
        'net.l2.bias':   0.1 * jax.random.normal(k4, (hidden,), dtype=jnp.float32),
        'net.l3.weight': 0.1 * jax.random.normal(k5, (out_dim, hidden), dtype=jnp.float32),
        'net.l3.bias':   0.1 * jax.random.normal(k6, (out_dim,), dtype=jnp.float32),
    }

    # --- small batch: single grid step, block == full dims ---
    x = jax.random.normal(k_x, (batch, in_dim), dtype=jnp.float32)
    ref = sinenet_reference(x, weights)
    pred = jax.block_until_ready(sinenet_forward(x, weights))
    assert pred.shape == (batch, out_dim)
    assert jnp.allclose(pred, ref, atol=1e-5, rtol=1e-5), "mismatch (small batch)"

    # --- larger batch: 2-step grid, masked partial last block, in-kernel
    #     chunk loop (tb=512 lanes, chunk=128, 4 chunks/step) ---
    xb = jax.random.normal(k_x, (1000, in_dim), dtype=jnp.float32)
    refb = sinenet_reference(xb, weights)
    predb = jax.block_until_ready(
        sinenet_forward(xb, weights, block_lanes=512, chunk_lanes=128))
    assert predb.shape == (1000, out_dim)
    assert jnp.allclose(predb, refb, atol=1e-5, rtol=1e-5), "mismatch (tiled batch)"

    print("KERNEL_OK")
</pallas_src>

<mosaic_0001>
module attributes {stable_mosaic.version = 11 : i64} {
  func.func @kernel(%arg0: i32, %arg1: memref<1x24xf32, #tpu.memory_space<vmem>>, %arg2: memref<40x1xf32, #tpu.memory_space<vmem>>, %arg3: memref<40x1xf32, #tpu.memory_space<vmem>>, %arg4: memref<40x40xf32, #tpu.memory_space<vmem>>, %arg5: memref<40x1xf32, #tpu.memory_space<vmem>>, %arg6: memref<40x1xf32, #tpu.memory_space<vmem>>, %arg7: memref<1xf32, #tpu.memory_space<smem>>, %arg8: memref<1x24xf32, #tpu.memory_space<vmem>>) attributes {dimension_semantics = [#tpu.dimension_semantics<parallel>], iteration_bounds = array<i64: 1>, scalar_prefetch = 0 : i64, scratch_operands = 0 : i64, tpu.core_type = #tpu.core_type<tc>, window_params = [{transform_indices = @transform_0, window_bounds = array<i64: 1, 24>}, {pipeline_mode = #tpu.pipeline_mode<synchronous>, transform_indices = @transform_1, window_bounds = array<i64: 40, 1>}, {pipeline_mode = #tpu.pipeline_mode<synchronous>, transform_indices = @transform_2, window_bounds = array<i64: 40, 1>}, {pipeline_mode = #tpu.pipeline_mode<synchronous>, transform_indices = @transform_3, window_bounds = array<i64: 40, 40>}, {pipeline_mode = #tpu.pipeline_mode<synchronous>, transform_indices = @transform_4, window_bounds = array<i64: 40, 1>}, {pipeline_mode = #tpu.pipeline_mode<synchronous>, transform_indices = @transform_5, window_bounds = array<i64: 40, 1>}, {transform_indices = @transform_6, window_bounds = array<i64: 1>}, {transform_indices = @transform_7, window_bounds = array<i64: 1, 24>}]} {
    %c0 = arith.constant 0 : index
    %c0_0 = arith.constant 0 : index
    %0 = vector.load %arg4[%c0, %c0_0] : memref<40x40xf32, #tpu.memory_space<vmem>>, vector<40x40xf32>
    %c0_1 = arith.constant 0 : index
    %c0_2 = arith.constant 0 : index
    %1 = vector.load %arg3[%c0_1, %c0_2] : memref<40x1xf32, #tpu.memory_space<vmem>>, vector<40x1xf32>
    %2 = vector.shape_cast %1 : vector<40x1xf32> to vector<40x1xf32>
    %3 = vector.broadcast %2 : vector<40x1xf32> to vector<40x24xf32>
    %c0_3 = arith.constant 0 : index
    %c0_4 = arith.constant 0 : index
    %4 = vector.load %arg5[%c0_3, %c0_4] : memref<40x1xf32, #tpu.memory_space<vmem>>, vector<40x1xf32>
    %5 = vector.shape_cast %4 : vector<40x1xf32> to vector<40x1xf32>
    %6 = vector.broadcast %5 : vector<40x1xf32> to vector<40x24xf32>
    %c0_5 = arith.constant 0 : index
    %c0_6 = arith.constant 0 : index
    %7 = vector.load %arg2[%c0_5, %c0_6] : memref<40x1xf32, #tpu.memory_space<vmem>>, vector<40x1xf32>
    %8 = vector.shape_cast %7 : vector<40x1xf32> to vector<40x1xf32>
    %9 = vector.broadcast %8 : vector<40x1xf32> to vector<40x24xf32>
    %c0_7 = arith.constant 0 : index
    %c0_8 = arith.constant 0 : index
    %10 = vector.load %arg6[%c0_7, %c0_8] : memref<40x1xf32, #tpu.memory_space<vmem>>, vector<40x1xf32>
    %11 = vector.shape_cast %10 : vector<40x1xf32> to vector<40x1xf32>
    %12 = vector.broadcast %11 : vector<40x1xf32> to vector<40x24xf32>
    %c0_9 = arith.constant 0 : index
    %13 = memref.load %arg7[%c0_9] : memref<1xf32, #tpu.memory_space<smem>>
    %c0_10 = arith.constant 0 : index
    %c0_11 = arith.constant 0 : index
    %14 = vector.load %arg1[%c0_10, %c0_11] : memref<1x24xf32, #tpu.memory_space<vmem>>, vector<1x24xf32>
    %15 = vector.broadcast %14 : vector<1x24xf32> to vector<40x24xf32>
    %16 = arith.mulf %9, %15 : vector<40x24xf32>
    %17 = arith.addf %16, %3 : vector<40x24xf32>
    %cst = arith.constant 0.000000e+00 : f32
    %18 = vector.broadcast %cst : f32 to vector<40x24xf32>
    %19 = arith.maximumf %17, %18 : vector<40x24xf32>
    %cst_12 = arith.constant dense<0.000000e+00> : vector<40x24xf32>
    %20 = tpu.matmul %0, %19, %cst_12 {dimension_numbers = #tpu.dot_dimension_numbers<[1], [0], [0], [1], [0, 0, 1, 1], [], []>} : vector<40x40xf32>, vector<40x24xf32>, vector<40x24xf32> -> vector<40x24xf32>
    %21 = arith.addf %20, %6 : vector<40x24xf32>
    %cst_13 = arith.constant 0.000000e+00 : f32
    %22 = vector.broadcast %cst_13 : f32 to vector<40x24xf32>
    %23 = arith.maximumf %21, %22 : vector<40x24xf32>
    %24 = arith.mulf %12, %23 : vector<40x24xf32>
    %cst_14 = arith.constant dense<0.000000e+00> : vector<24xf32>
    %25 = vector.multi_reduction <add>, %24, %cst_14 [0] : vector<40x24xf32> to vector<24xf32>
    %26 = vector.shape_cast %25 : vector<24xf32> to vector<1x24xf32>
    %27 = vector.broadcast %13 : f32 to vector<1x24xf32>
    %28 = arith.addf %26, %27 : vector<1x24xf32>
    %c0_15 = arith.constant 0 : index
    %c0_16 = arith.constant 0 : index
    %29 = vector.load %arg8[%c0_15, %c0_16] : memref<1x24xf32, #tpu.memory_space<vmem>>, vector<1x24xf32>
    tpu.vector_store %arg8[%c0_15, %c0_16], %28 {strides = array<i32>} : memref<1x24xf32, #tpu.memory_space<vmem>>, vector<1x24xf32>,
    return
  }
  func.func @transform_0(%arg0: i32) -> (i32, i32) {
    %c0_i32 = arith.constant 0 : i32
    %c0_i32_0 = arith.constant 0 : i32
    return %c0_i32, %arg0 : i32, i32
  }
  func.func @transform_1(%arg0: i32) -> (i32, i32) {
    %c0_i32 = arith.constant 0 : i32
    %c0_i32_0 = arith.constant 0 : i32
    %c0_i32_1 = arith.constant 0 : i32
    return %c0_i32, %c0_i32_0 : i32, i32
  }
  func.func @transform_2(%arg0: i32) -> (i32, i32) {
    %c0_i32 = arith.constant 0 : i32
    %c0_i32_0 = arith.constant 0 : i32
    %c0_i32_1 = arith.constant 0 : i32
    return %c0_i32, %c0_i32_0 : i32, i32
  }
  func.func @transform_3(%arg0: i32) -> (i32, i32) {
    %c0_i32 = arith.constant 0 : i32
    %c0_i32_0 = arith.constant 0 : i32
    %c0_i32_1 = arith.constant 0 : i32
    return %c0_i32, %c0_i32_0 : i32, i32
  }
  func.func @transform_4(%arg0: i32) -> (i32, i32) {
    %c0_i32 = arith.constant 0 : i32
    %c0_i32_0 = arith.constant 0 : i32
    %c0_i32_1 = arith.constant 0 : i32
    return %c0_i32, %c0_i32_0 : i32, i32
  }
  func.func @transform_5(%arg0: i32) -> (i32, i32) {
    %c0_i32 = arith.constant 0 : i32
    %c0_i32_0 = arith.constant 0 : i32
    %c0_i32_1 = arith.constant 0 : i32
    return %c0_i32, %c0_i32_0 : i32, i32
  }
  func.func @transform_6(%arg0: i32) -> i32 {
    %c0_i32 = arith.constant 0 : i32
    %c0_i32_0 = arith.constant 0 : i32
    return %c0_i32 : i32
  }
  func.func @transform_7(%arg0: i32) -> (i32, i32) {
    %c0_i32 = arith.constant 0 : i32
    %c0_i32_0 = arith.constant 0 : i32
    return %c0_i32, %arg0 : i32, i32
  }
}

</mosaic_0001>

<llo_original>
// kernel: tpu_custom_call.1
$region0: #{tpu_custom_call.1}
  #allocation0 [shape = 'u32[]', space=smem, size = 0x4, offset = 0x4, fixed_abs, tag = 'smem constant byte address 0x4 - core index']
  #allocation1 [shape = 'u32[144,128]{1,0:T(1,128)}', space=vmem, size = 0x12000, scoped, tag = 'internal scratch']
  #allocation2 [shape = 'f32[1]{0:T(128)S(6)}', space=smem, size = 0x200, scoped, tag = 'scoped memory for tpu_custom_call.1']
  %s0 = inlined_call_operand.vmem [shape: f32[1,24], index: 0, kind: input, shape index: {}]
  %s1 = inlined_call_operand.vmem [shape: f32[40,1], index: 1, kind: input, shape index: {}]
  %s2 = inlined_call_operand.vmem [shape: f32[40,1], index: 2, kind: input, shape index: {}]
  %s3 = inlined_call_operand.vmem [shape: f32[40,40], index: 3, kind: input, shape index: {}]
  %s4 = inlined_call_operand.vmem [shape: f32[40,1], index: 4, kind: input, shape index: {}]
  %s5 = inlined_call_operand.vmem [shape: f32[40,1], index: 5, kind: input, shape index: {}]
  %s6 = inlined_call_operand.<no memory space> [shape: f32[1], index: 6, kind: input, shape index: {}]
  %s7 = inlined_call_operand.hbm [shape: f32[1,24], index: 7, kind: output, shape index: {}]
  %s8 = sld [smem:[#allocation0]]
  $region38: #{tpu_custom_call.1} parent=0
    _
  %s10 = ssub.s32 1, %s8
  %s11 = scalar_select 0, %s10, %s8
  %12 = sst [smem:[#allocation2]] %s6
  $region1: #{tpu_custom_call.1} parent=0
    #allocation3 [shape = 'u8[512]{0}', space=vmem, size = 0x400, scoped, tag = 'output window, operand 0, single buffered']
    #allocation4 [shape = 's32[1]{0}', space=sflag, size = 0x4, scoped, tag = 'scoped memory for tpu_custom_call.1']
    %13 = vsyncpa [#allocation4], 0
    // Predicated region
    $region2: #{tpu_custom_call.1} parent=1 // pred_check
      _
    $region3: #{tpu_custom_call.1} parent=1 // pred_check_branch
      %15 = sbr.rel (0) target = $region5
    $region4: #{tpu_custom_call.1} parent=1 // pred_region
      _
    $region5: #{tpu_custom_call.1} parent=1 // pred_fallthru
      _
    // Predicated region
    $region6: #{tpu_custom_call.1} parent=1 // pred_check
      _
    $region7: #{tpu_custom_call.1} parent=1 // pred_check_branch
      %17 = sbr.rel (0) target = $region9
    $region8: #{tpu_custom_call.1} parent=1 // pred_region
      _
    $region9: #{tpu_custom_call.1} parent=1 // pred_fallthru
      _
    // Predicated region
    $region10: #{tpu_custom_call.1} parent=1 // pred_check
      _
    $region11: #{tpu_custom_call.1} parent=1 // pred_check_branch
      %19 = sbr.rel (0) target = $region13
    $region12: #{tpu_custom_call.1} parent=1 // pred_region
      _
    $region13: #{tpu_custom_call.1} parent=1 // pred_fallthru
      _
    // Predicated region
    $region14: #{tpu_custom_call.1} parent=1 // pred_check
      _
    $region15: #{tpu_custom_call.1} parent=1 // pred_check_branch
      %21 = sbr.rel (0) target = $region17
    $region16: #{tpu_custom_call.1} parent=1 // pred_region
      _
    $region17: #{tpu_custom_call.1} parent=1 // pred_fallthru
      _
    // Predicated region
    $region18: #{tpu_custom_call.1} parent=1 // pred_check
      _
    $region19: #{tpu_custom_call.1} parent=1 // pred_check_branch
      %23 = sbr.rel (0) target = $region21
    $region20: #{tpu_custom_call.1} parent=1 // pred_region
      _
    $region21: #{tpu_custom_call.1} parent=1 // pred_fallthru
      _
    // Predicated region
    $region22: #{tpu_custom_call.1} parent=1 // pred_check
      _
    $region23: #{tpu_custom_call.1} parent=1 // pred_check_branch
      %25 = sbr.rel (0) target = $region25
    $region24: #{tpu_custom_call.1} parent=1 // pred_region
      _
    $region25: #{tpu_custom_call.1} parent=1 // pred_fallthru
      _
    // Predicated region
    $region26: #{tpu_custom_call.1} parent=1 // pred_check
      _
    $region27: #{tpu_custom_call.1} parent=1 // pred_check_branch
      %27 = sbr.rel (0) target = $region29
    $region28: #{tpu_custom_call.1} parent=1 // pred_region
      _
    $region29: #{tpu_custom_call.1} parent=1 // pred_fallthru
      _
    %v28 = vld [vmem:[%s3] sm:$0xff]
    %v29 = vld [vmem:[%s3 + $0x8] sm:$0xff]
    %v30 = vld [vmem:[%s3 + $0x10] sm:$0xff]
    %v31 = vld [vmem:[%s3 + $0x18] sm:$0xff]
    %v32 = vld [vmem:[%s3 + $0x20] sm:$0xff]
    %v33 = vld [vmem:[%s2] sm:$0xff]
    %v34 = vld [vmem:[%s2 + $0x8] sm:$0xff]
    %v35 = vld [vmem:[%s2 + $0x10] sm:$0xff]
    %v36 = vld [vmem:[%s2 + $0x18] sm:$0xff]
    %v37 = vld [vmem:[%s2 + $0x20] sm:$0xff]
    %39 = vset.pattern.permute.xlu0 0
    %40 = vperm.xlu0 %39, %v33
    %v41 = vpop.permute.xlu0 %40
    %44 = vset.pattern.permute.xlu0 0
    %45 = vperm.xlu0 %44, %v34
    %v46 = vpop.permute.xlu0 %45
    %49 = vset.pattern.permute.xlu0 0
    %50 = vperm.xlu0 %49, %v35
    %v51 = vpop.permute.xlu0 %50
    %54 = vset.pattern.permute.xlu0 0
    %55 = vperm.xlu0 %54, %v36
    %v56 = vpop.permute.xlu0 %55
    %59 = vset.pattern.permute.xlu0 0
    %60 = vperm.xlu0 %59, %v37
    %v61 = vpop.permute.xlu0 %60
    %v63 = vld [vmem:[%s4] sm:$0xff]
    %v64 = vld [vmem:[%s4 + $0x8] sm:$0xff]
    %v65 = vld [vmem:[%s4 + $0x10] sm:$0xff]
    %v66 = vld [vmem:[%s4 + $0x18] sm:$0xff]
    %v67 = vld [vmem:[%s4 + $0x20] sm:$0xff]
    %69 = vset.pattern.permute.xlu0 0
    %70 = vperm.xlu0 %69, %v63
    %v71 = vpop.permute.xlu0 %70
    %74 = vset.pattern.permute.xlu0 0
    %75 = vperm.xlu0 %74, %v64
    %v76 = vpop.permute.xlu0 %75
    %79 = vset.pattern.permute.xlu0 0
    %80 = vperm.xlu0 %79, %v65
    %v81 = vpop.permute.xlu0 %80
    %84 = vset.pattern.permute.xlu0 0
    %85 = vperm.xlu0 %84, %v66
    %v86 = vpop.permute.xlu0 %85
    %89 = vset.pattern.permute.xlu0 0
    %90 = vperm.xlu0 %89, %v67
    %v91 = vpop.permute.xlu0 %90
    %v93 = vld [vmem:[%s1] sm:$0xff]
    %v94 = vld [vmem:[%s1 + $0x8] sm:$0xff]
    %v95 = vld [vmem:[%s1 + $0x10] sm:$0xff]
    %v96 = vld [vmem:[%s1 + $0x18] sm:$0xff]
    %v97 = vld [vmem:[%s1 + $0x20] sm:$0xff]
    %99 = vset.pattern.permute.xlu0 0
    %100 = vperm.xlu0 %99, %v93
    %v101 = vpop.permute.xlu0 %100
    %104 = vset.pattern.permute.xlu0 0
    %105 = vperm.xlu0 %104, %v94
    %v106 = vpop.permute.xlu0 %105
    %109 = vset.pattern.permute.xlu0 0
    %110 = vperm.xlu0 %109, %v95
    %v111 = vpop.permute.xlu0 %110
    %114 = vset.pattern.permute.xlu0 0
    %115 = vperm.xlu0 %114, %v96
    %v116 = vpop.permute.xlu0 %115
    %119 = vset.pattern.permute.xlu0 0
    %120 = vperm.xlu0 %119, %v97
    %v121 = vpop.permute.xlu0 %120
    %v123 = vld [vmem:[%s5] sm:$0xff]
    %v124 = vld [vmem:[%s5 + $0x8] sm:$0xff]
    %v125 = vld [vmem:[%s5 + $0x10] sm:$0xff]
    %v126 = vld [vmem:[%s5 + $0x18] sm:$0xff]
    %v127 = vld [vmem:[%s5 + $0x20] sm:$0xff]
    %129 = vset.pattern.permute.xlu0 0
    %130 = vperm.xlu0 %129, %v123
    %v131 = vpop.permute.xlu0 %130
    %134 = vset.pattern.permute.xlu0 0
    %135 = vperm.xlu0 %134, %v124
    %v136 = vpop.permute.xlu0 %135
    %139 = vset.pattern.permute.xlu0 0
    %140 = vperm.xlu0 %139, %v125
    %v141 = vpop.permute.xlu0 %140
    %144 = vset.pattern.permute.xlu0 0
    %145 = vperm.xlu0 %144, %v126
    %v146 = vpop.permute.xlu0 %145
    %149 = vset.pattern.permute.xlu0 0
    %150 = vperm.xlu0 %149, %v127
    %v151 = vpop.permute.xlu0 %150
    %s153 = sld [smem:[#allocation2]]
    %v154 = vld [vmem:[%s0] sm:$0x1]
    %v156 = vlaneseq
    %v157 = vshrl.u32 %v156, 7
    %v158 = vsub.s32 0, %v157
    %v159 = vrot.slane %v154, %v158
    %v161 = vmul.f32 %v101, %v159
    %v162 = vmul.f32 %v106, %v159
    %v163 = vmul.f32 %v111, %v159
    %v164 = vmul.f32 %v116, %v159
    %v165 = vmul.f32 %v121, %v159
    %v166 = vadd.f32 %v161, %v41
    %v167 = vadd.f32 %v162, %v46
    %v168 = vadd.f32 %v163, %v51
    %v169 = vadd.f32 %v164, %v56
    %v170 = vadd.f32 %v165, %v61
    %v171 = vmax.f32 %v166, 0.0
    %v172 = vmax.f32 %v167, 0.0
    %v173 = vmax.f32 %v168, 0.0
    %v174 = vmax.f32 %v169, 0.0
    %v175 = vmax.f32 %v170, 0.0
    %vm176 = vcmask 326656
    %v178 = vsel %vm176, %v28, 0
    %v181 = vsel %vm176, %v29, 0
    %v184 = vsel %vm176, %v30, 0
    %v187 = vsel %vm176, %v31, 0
    %v190 = vsel %vm176, %v32, 0
    %192 = vmatprep.subr.mxu0 0.0
    %193 = vmatpush1.msra.mxu0 %v171
    %194 = vmatprep.subr.mxu0 0.0
    %195 = vmatpush1.msra.mxu0 %v172
    %196 = vmatprep.subr.mxu0 0.0
    %197 = vmatpush1.msra.mxu0 %v173
    %198 = vmatprep.subr.mxu0 0.0
    %199 = vmatpush1.msra.mxu0 %v174
    %200 = vmatprep.subr.mxu0 0.0
    %201 = vmatpush1.msra.mxu0 %v175
    %202 = vmatprep.subr.mxu0 0.0
    %203 = vmatpush1.msra.mxu0 0.0
    %204 = vmatprep.subr.mxu0 0.0
    %205 = vmatpush1.msra.mxu0 0.0
    %206 = vmatprep.subr.mxu0 0.0
    %207 = vmatpush1.msra.mxu0 0.0
    %208 = vmatprep.subr.mxu0 0.0
    %209 = vmatpush1.msra.mxu0 0.0
    %210 = vmatprep.subr.mxu0 0.0
    %211 = vmatpush1.msra.mxu0 0.0
    %212 = vmatprep.subr.mxu0 0.0
    %213 = vmatpush1.msra.mxu0 0.0
    %214 = vmatprep.subr.mxu0 0.0
    %215 = vmatpush1.msra.mxu0 0.0
    %216 = vmatprep.subr.mxu0 0.0
    %217 = vmatpush1.msra.mxu0 0.0
    %218 = vmatprep.subr.mxu0 0.0
    %219 = vmatpush1.msra.mxu0 0.0
    %220 = vmatprep.subr.mxu0 0.0
    %221 = vmatpush1.msra.mxu0 0.0
    %222 = vmatprep.subr.mxu0 0.0
    %223 = vmatpush1.msra.mxu0 0.0
    %224 = vmatprep.subr.mxu0 0.0
    %225 = vmatpush1.msra.mxu0 0.0
    %226 = vmatprep.subr.mxu0 0.0
    %227 = vmatpush1.msra.mxu0 0.0
    %228 = vmatprep.subr.mxu0 0.0
    %229 = vmatpush1.msra.mxu0 0.0
    %230 = vmatprep.subr.mxu0 0.0
    %231 = vmatpush1.msra.mxu0 0.0
    %232 = vmatprep.subr.mxu0 0.0
    %233 = vmatpush1.msra.mxu0 0.0
    %234 = vmatprep.subr.mxu0 0.0
    %235 = vmatpush1.msra.mxu0 0.0
    %236 = vmatprep.subr.mxu0 0.0
    %237 = vmatpush1.msra.mxu0 0.0
    %238 = vmatprep.subr.mxu0 0.0
    %239 = vmatpush1.msra.mxu0 0.0
    %240 = vmatprep.subr.mxu0 0.0
    %241 = vmatpush1.msra.mxu0 0.0
    %242 = vmatprep.subr.mxu0 0.0
    %243 = vmatpush1.msra.mxu0 0.0
    %244 = vmatprep.subr.mxu0 0.0
    %245 = vmatpush1.msra.mxu0 0.0
    %246 = vmatprep.subr.mxu0 0.0
    %247 = vmatpush1.msra.mxu0 0.0
    %248 = vmatprep.subr.mxu0 0.0
    %249 = vmatpush1.msra.mxu0 0.0
    %250 = vmatprep.subr.mxu0 0.0
    %251 = vmatpush1.msra.mxu0 0.0
    %252 = vmatprep.subr.mxu0 0.0
    %253 = vmatpush1.msra.mxu0 0.0
    %254 = vmatprep.subr.mxu0 0.0
    %255 = vmatpush1.msra.mxu0 0.0
    %256 = vmatprep.mubr.f32.mxu0 0.0
    %257 = vmatmul.mubr.f32.gmra.mrb[0].mxu0 %v178
    %v258 = vpop.f32.mrb[0].mxu0
    %v259 = vadd.f32 %v71, %v258
    %v260 = vpop.f32.mrb[0].mxu0
    %261 = vmatprep.mubr.f32.mxu0 0.0
    %262 = vmatmul.mubr.f32.gmra.mrb[0].mxu0 %v181
    %v263 = vpop.f32.mrb[0].mxu0
    %v264 = vadd.f32 %v76, %v263
    %v265 = vpop.f32.mrb[0].mxu0
    %266 = vmatprep.mubr.f32.mxu0 0.0
    %267 = vmatmul.mubr.f32.gmra.mrb[0].mxu0 %v184
    %v268 = vpop.f32.mrb[0].mxu0
    %v269 = vadd.f32 %v81, %v268
    %v270 = vpop.f32.mrb[0].mxu0
    %271 = vmatprep.mubr.f32.mxu0 0.0
    %272 = vmatmul.mubr.f32.gmra.mrb[0].mxu0 %v187
    %v273 = vpop.f32.mrb[0].mxu0
    %v274 = vadd.f32 %v86, %v273
    %v275 = vpop.f32.mrb[0].mxu0
    %276 = vmatprep.mubr.f32.mxu0 0.0
    %277 = vmatmul.mubr.f32.gmra.mrb[0].mxu0 %v190
    %v278 = vpop.f32.mrb[0].mxu0
    %v279 = vadd.f32 %v91, %v278
    %v280 = vpop.f32.mrb[0].mxu0
    %281 = vdwg.mxu0
    %v282 = vmax.f32 %v259, 0.0
    %v283 = vmax.f32 %v264, 0.0
    %v284 = vmax.f32 %v269, 0.0
    %v285 = vmax.f32 %v274, 0.0
    %v286 = vmax.f32 %v279, 0.0
    %v287 = vmul.f32 %v131, %v282
    %v288 = vmul.f32 %v136, %v283
    %v289 = vmul.f32 %v141, %v284
    %v290 = vmul.f32 %v146, %v285
    %v291 = vmul.f32 %v151, %v286
    %vm292 = vcmask 195584
    %v293 = vsel %vm292, %v287, 0.0
    %v294 = vsel %vm292, %v288, 0.0
    %v295 = vadd.f32 %v293, %v294
    %v296 = vsel %vm292, %v289, 0.0
    %v297 = vadd.f32 %v295, %v296
    %v298 = vsel %vm292, %v290, 0.0
    %v299 = vadd.f32 %v297, %v298
    %v300 = vsel %vm292, %v291, 0.0
    %v301 = vadd.f32 %v299, %v300
    %v302 = vrot.slane %v301, 4
    %v303 = vadd.f32 %v301, %v302
    %v304 = vrot.slane %v303, 2
    %v305 = vadd.f32 %v303, %v304
    %v306 = vrot.slane %v305, 1
    %v307 = vadd.f32 %v305, %v306
    %v308 = vstv %s153
    %v309 = vadd.f32 %v307, %v308
    %vm310 = vcmask 188416
    %311 = vst.msk [vmem:[#allocation3] sm:$0x1] %vm310, %v309
    // Predicated region
    $region30: #{tpu_custom_call.1} parent=1 // pred_check
      _
    $region31: #{tpu_custom_call.1} parent=1 // pred_check_branch
      %313 = sbr.rel (0) target = $region33
    $region32: #{tpu_custom_call.1} parent=1 // pred_region
      %s315 = ssub.s32 16, 16
      %316 = vsyncadd [#allocation4], %s315
      %s318 = sshll.u32 [#allocation3], 4
      %s319 = int_to_ptr.vmem [resolvable:$true] %s318
      %321 = dma.vmem_to_hbm [thread:$0]  %s319, 16, %s7, [#allocation4]
    $region33: #{tpu_custom_call.1} parent=1 // pred_fallthru
      _
    // Predicated region
    $region34: #{tpu_custom_call.1} parent=1 // pred_check
      _
    $region35: #{tpu_custom_call.1} parent=1 // pred_check_branch
      %323 = sbr.rel (0) target = $region37
    $region36: #{tpu_custom_call.1} parent=1 // pred_region
      %324 = dma.done [#allocation4], 16
    $region37: #{tpu_custom_call.1} parent=1 // pred_fallthru
      _
    %325 = vsyncpa [#allocation4], 1

</llo_original>
